<compile_context>
chip_gen: v6e
topology: v6e:2x2x1
jax: 0.10.0
libtpu: 0.0.40
codegen_flags: <defaults>
</compile_context>

<pallas_src>
import jax
import jax.numpy as jnp
from jax.experimental import pallas as pl
from jax.experimental.pallas import tpu as pltpu


def _cdiv(a, b):
    return (a + b - 1) // b


def _round_up(a, m):
    return _cdiv(a, m) * m


def wect_kernel(lin_ref, nh_ref, eh_ref, mn_ref, me_ref, out_ref):
    """Grid = (bump-step tile s [parallel], node/edge chunk k [arbitrary, reduction]).

    lin_ref : (1, 1, L)  per-lane thresholds * 250, lane = s_local*T + t   (f32)
    nh_ref  : (Kn, T)    node heights * 250, this k-chunk                  (f32)
    eh_ref  : (Ke, T)    edge heights * 250, this k-chunk                  (f32)
    mn_ref  : (B, Kn)    0.5 * node->graph one-hot chunk                   (bf16)
    me_ref  : (B, Ke)    0.5 * edge->graph one-hot * edge_weight chunk     (bf16)
    out_ref : (1, B, L)  f32, resident across k (accumulator)
    """
    k = pl.program_id(1)

    @pl.when(k == 0)
    def _init():
        out_ref[...] = jnp.zeros_like(out_ref)

    L = lin_ref.shape[-1]
    T = nh_ref.shape[-1]
    reps = L // T

    lin_lane = lin_ref[0]                                    # (1, L) f32

    def rep(h):                                              # (K, T) -> (K, L) lane replicate
        return jnp.concatenate([h] * reps, axis=-1) if reps > 1 else h

    # sigmoid(500*(lin-h)) = 0.5 + 0.5*tanh(250*(lin-h)); the 0.5's live in the scatter
    # matrices / wrapper bias, so per element this is one f32 VPU subtract + one EUP tanh.
    # TODO(synk): cast the tanh argument to bf16 on v6e/v7x (2x EUP rate); kept f32 so the
    # identical kernel is also right on v5e (no bf16 EUP/VPU).
    t_n = jnp.tanh(lin_lane - rep(nh_ref[...])).astype(jnp.bfloat16)   # (Kn, L)
    t_e = jnp.tanh(lin_lane - rep(eh_ref[...])).astype(jnp.bfloat16)   # (Ke, L)

    # One lane-dense MXU dot per term, f32 accumulation.
    node_term = jnp.dot(mn_ref[...], t_n, preferred_element_type=jnp.float32)  # (B, L)
    edge_term = jnp.dot(me_ref[...], t_e, preferred_element_type=jnp.float32)  # (B, L)

    out_ref[...] += (node_term - edge_term)[None]


def wect_pallas(x, edge_index, edge_weights, batch, v, lin, num_graphs,
                tile_s=4, node_chunk=1024, edge_chunk=1024):
    """Pallas WECT forward. Returns (B, bump_steps, num_thetas) like the torch module."""
    N = x.shape[0]
    E = edge_index.shape[1]
    T = v.shape[1]
    S = lin.shape[0]
    B = int(num_graphs)
    assert S % tile_s == 0
    num_tiles = S // tile_s
    L = tile_s * T
    assert L % 128 == 0, "tile_s * num_thetas must be a multiple of 128 (lane-dense output)"

    # ---------- plain-JAX glue (grid-invariant, exact f32) ----------
    xf = x.astype(jnp.float32)
    vf = v.astype(jnp.float32)
    # exact elementwise projection (no MXU rounding; 500x amplification makes this matter)
    nh = xf[:, 0:1] * vf[0:1, :] + xf[:, 1:2] * vf[1:2, :]              # (N, T)
    eh = jnp.maximum(nh[edge_index[0]], nh[edge_index[1]])              # (E, T)
    linf = lin.astype(jnp.float32)
    ew = edge_weights.astype(jnp.float32)

    # fold the sigmoid affine: pre-scale by 250, 0.5 goes into the scatter matrices,
    # constant 0.5*(node_count - sum_w) per graph is added after the kernel.
    nh250 = 250.0 * nh
    eh250 = 250.0 * eh
    lin250 = 250.0 * linf

    # ---------- K-tiling of nodes / edges (shared reduction grid axis) ----------
    num_k = max(_cdiv(N, node_chunk), _cdiv(E, edge_chunk), 1)
    Kn = _round_up(_cdiv(N, num_k), 128)     # multiple of 128: lane dim of the (B, Kn) block
    Ke = _round_up(_cdiv(E, num_k), 128)
    N_pad = Kn * num_k
    E_pad = Ke * num_k

    nh_p = jnp.zeros((N_pad, T), jnp.float32).at[:N].set(nh250)
    eh_p = jnp.zeros((E_pad, T), jnp.float32).at[:E].set(eh250)

    # scatter matrices (0.5-scaled one-hot); padded columns are zero => no contribution.
    m_node = jnp.zeros((B, N_pad), jnp.float32)
    m_node = m_node.at[:, :N].set(0.5 * jax.nn.one_hot(batch, B, dtype=jnp.float32).T)
    m_node = m_node.astype(jnp.bfloat16)
    m_edge = jnp.zeros((B, E_pad), jnp.float32)
    m_edge = m_edge.at[:, :E].set(
        0.5 * jax.nn.one_hot(batch[edge_index[0]], B, dtype=jnp.float32).T * ew[None, :])
    m_edge = m_edge.astype(jnp.bfloat16)

    # per-tile, per-lane thresholds: lane = s_local*T + t
    lin_lanes = jnp.repeat(lin250.reshape(num_tiles, tile_s), T, axis=1)
    lin_lanes = lin_lanes.reshape(num_tiles, 1, L)                       # (num_tiles, 1, L)

    # per-graph constant part of the sigmoid affine (added outside the kernel, exact f32)
    node_count = jax.ops.segment_sum(jnp.ones((N,), jnp.float32), batch, num_segments=B)
    w_sum = jax.ops.segment_sum(ew, batch[edge_index[0]], num_segments=B)
    bias = 0.5 * (node_count - w_sum)                                    # (B,)

    # VMEM budget: double-buffered per-step blocks + elementwise temporaries + headroom.
    block_bytes = 2 * (L * 4 + Kn * T * 4 + Ke * T * 4
                       + B * Kn * 2 + B * Ke * 2 + B * L * 4)
    tmp_bytes = 4 * (Kn + Ke) * L * 4
    vmem_limit = int(min(max(block_bytes + tmp_bytes + (8 << 20), 32 << 20), 56 << 20))

    cost = pl.CostEstimate(
        flops=2 * B * (N_pad + E_pad) * S * T + 4 * (N_pad + E_pad) * S * T,
        transcendentals=(N_pad + E_pad) * S * T,
        bytes_accessed=num_tiles * (4 * T * (N_pad + E_pad) + 2 * B * (N_pad + E_pad)
                                    + 4 * B * L + 4 * L),
    )

    out_tiled = pl.pallas_call(
        wect_kernel,
        out_shape=jax.ShapeDtypeStruct((num_tiles, B, L), jnp.float32),
        grid_spec=pltpu.PrefetchScalarGridSpec(
            num_scalar_prefetch=0,
            grid=(num_tiles, num_k),
            in_specs=[
                pl.BlockSpec((1, 1, L), lambda s, k: (s, 0, 0)),   # 250*lin lanes (per tile)
                pl.BlockSpec((Kn, T), lambda s, k: (k, 0)),        # 250*nh chunk
                pl.BlockSpec((Ke, T), lambda s, k: (k, 0)),        # 250*eh chunk
                pl.BlockSpec((B, Kn), lambda s, k: (0, k)),        # 0.5*one-hot (nodes)
                pl.BlockSpec((B, Ke), lambda s, k: (0, k)),        # 0.5*one-hot*w (edges)
            ],
            out_specs=pl.BlockSpec((1, B, L), lambda s, k: (s, 0, 0)),  # resident across k
        ),
        compiler_params=pltpu.CompilerParams(
            dimension_semantics=("parallel", "arbitrary"),
            vmem_limit_bytes=vmem_limit),
        cost_estimate=cost,
    )(lin_lanes, nh_p, eh_p, m_node, m_edge)

    # unfold lanes back to (S, T), match torch layout (B, bump_steps, num_thetas), add bias
    out = out_tiled.reshape(num_tiles, B, tile_s, T)
    out = jnp.transpose(out, (1, 0, 2, 3)).reshape(B, S, T)
    return out + bias[:, None, None]


def wect_reference(x, edge_index, edge_weights, batch, v, lin, num_graphs):
    """Pure-JAX reference mirroring the PyTorch semantics (exact f32)."""
    B = int(num_graphs)
    xf = x.astype(jnp.float32)
    vf = v.astype(jnp.float32)
    nh = xf[:, 0:1] * vf[0:1, :] + xf[:, 1:2] * vf[1:2, :]              # (N, T)
    eh = jnp.maximum(nh[edge_index[0]], nh[edge_index[1]])              # (E, T)
    sig = lambda z: 1.0 / (1.0 + jnp.exp(-z))
    ecc_n = sig(500.0 * (lin[:, None, None] - nh[None]))                # (S, N, T), node w = 1
    ecc_e = (sig(500.0 * (lin[:, None, None] - eh[None]))
             * edge_weights[None, :, None])                             # (S, E, T)
    node_term = jax.ops.segment_sum(ecc_n.transpose(1, 0, 2), batch,
                                    num_segments=B)                     # (B, S, T)
    edge_term = jax.ops.segment_sum(ecc_e.transpose(1, 0, 2), batch[edge_index[0]],
                                    num_segments=B)                     # (B, S, T)
    return node_term - edge_term


if __name__ == "__main__":
    # Config (EctConfig analogue): R=1.0, bump_steps=16, num_thetas=32
    R = 1.0
    bump_steps = 16
    num_thetas = 32

    # deterministic "layer parameters" (from __init__)
    lin = jnp.linspace(-R, R, bump_steps).astype(jnp.float32)                   # (S,)
    thetas = jnp.linspace(0.0, 2.0 * jnp.pi, num_thetas)
    v = jnp.stack([jnp.sin(thetas), jnp.cos(thetas)]).astype(jnp.float32)       # (2, T)

    # synthetic graph batch: 2 graphs x 8 nodes, 12 intra-graph edges each
    N, E, B = 16, 24, 2
    key = jax.random.PRNGKey(0)
    k1, k2, k3, k4, k5, k6 = jax.random.split(key, 6)
    x = jax.random.normal(k1, (N, 2), jnp.float32)                              # node coords
    batch = jnp.concatenate([jnp.zeros(8, jnp.int32), jnp.ones(8, jnp.int32)])  # (N,)
    src = jnp.concatenate([jax.random.randint(k2, (12,), 0, 8),
                           jax.random.randint(k3, (12,), 8, 16)]).astype(jnp.int32)
    dst = jnp.concatenate([jax.random.randint(k4, (12,), 0, 8),
                           jax.random.randint(k5, (12,), 8, 16)]).astype(jnp.int32)
    edge_index = jnp.stack([src, dst])                                          # (2, E)
    edge_weights = jax.random.uniform(k6, (E,), jnp.float32)                    # (E,)

    out = wect_pallas(x, edge_index, edge_weights, batch, v, lin, num_graphs=B)
    out = jax.block_until_ready(out)

    ref = wect_reference(x, edge_index, edge_weights, batch, v, lin, num_graphs=B)
    assert out.shape == (B, bump_steps, num_thetas), out.shape
    # bf16 MXU multiplicands (0.5*one-hot*w, tanh output) => ~1e-2 abs at these graph sizes
    err = float(jnp.max(jnp.abs(out - ref)))
    assert jnp.allclose(out, ref, rtol=2e-2, atol=2e-2), err

    print("KERNEL_OK")
</pallas_src>

<mosaic_0001>
module attributes {stable_mosaic.version = 11 : i64} {
  func.func @wect_kernel(%arg0: i32, %arg1: i32, %arg2: memref<1x1x128xf32, #tpu.memory_space<vmem>>, %arg3: memref<128x32xf32, #tpu.memory_space<vmem>>, %arg4: memref<128x32xf32, #tpu.memory_space<vmem>>, %arg5: memref<2x128xbf16, #tpu.memory_space<vmem>>, %arg6: memref<2x128xbf16, #tpu.memory_space<vmem>>, %arg7: memref<1x2x128xf32, #tpu.memory_space<vmem>>) attributes {dimension_semantics = [#tpu.dimension_semantics<parallel>, #tpu.dimension_semantics<arbitrary>], iteration_bounds = array<i64: 4, 1>, scalar_prefetch = 0 : i64, scratch_operands = 0 : i64, tpu.core_type = #tpu.core_type<tc>, window_params = [{transform_indices = @transform_0, window_bounds = array<i64: 1, 1, 128>}, {transform_indices = @transform_1, window_bounds = array<i64: 128, 32>}, {transform_indices = @transform_2, window_bounds = array<i64: 128, 32>}, {transform_indices = @transform_3, window_bounds = array<i64: 2, 128>}, {transform_indices = @transform_4, window_bounds = array<i64: 2, 128>}, {transform_indices = @transform_5, window_bounds = array<i64: 1, 2, 128>}]} {
    %c0_i32 = arith.constant 0 : i32
    %0 = arith.cmpi eq, %arg1, %c0_i32 : i32
    %1 = arith.extui %0 : i1 to i32
    %c0_i32_0 = arith.constant 0 : i32
    %2 = arith.cmpi ne, %1, %c0_i32_0 : i32
    scf.if %2 {
      %cst_18 = arith.constant 0.000000e+00 : f32
      %26 = vector.broadcast %cst_18 : f32 to vector<1x2x128xf32>
      %c0_19 = arith.constant 0 : index
      %c0_20 = arith.constant 0 : index
      %c0_21 = arith.constant 0 : index
      %27 = vector.load %arg7[%c0_19, %c0_20, %c0_21] : memref<1x2x128xf32, #tpu.memory_space<vmem>>, vector<1x2x128xf32>
      tpu.vector_store %arg7[%c0_19, %c0_20, %c0_21], %26 {strides = array<i32>} : memref<1x2x128xf32, #tpu.memory_space<vmem>>, vector<1x2x128xf32>,
    } else {
    }
    %c0 = arith.constant 0 : index
    %c0_1 = arith.constant 0 : index
    %c0_2 = arith.constant 0 : index
    %3 = vector.load %arg2[%c0, %c0_1, %c0_2] : memref<1x1x128xf32, #tpu.memory_space<vmem>>, vector<1x1x128xf32>
    %4 = vector.shape_cast %3 : vector<1x1x128xf32> to vector<1x128xf32>
    %c0_3 = arith.constant 0 : index
    %c0_4 = arith.constant 0 : index
    %5 = vector.load %arg3[%c0_3, %c0_4] : memref<128x32xf32, #tpu.memory_space<vmem>>, vector<128x32xf32>
    %6 = tpu.concatenate %5, %5, %5, %5 in 1 : vector<128x32xf32>, vector<128x32xf32>, vector<128x32xf32>, vector<128x32xf32> -> vector<128x128xf32>
    %7 = vector.broadcast %4 : vector<1x128xf32> to vector<128x128xf32>
    %8 = arith.subf %7, %6 : vector<128x128xf32>
    %9 = math.tanh %8 : vector<128x128xf32>
    %10 = arith.truncf %9 : vector<128x128xf32> to vector<128x128xbf16>
    %c0_5 = arith.constant 0 : index
    %c0_6 = arith.constant 0 : index
    %11 = vector.load %arg4[%c0_5, %c0_6] : memref<128x32xf32, #tpu.memory_space<vmem>>, vector<128x32xf32>
    %12 = tpu.concatenate %11, %11, %11, %11 in 1 : vector<128x32xf32>, vector<128x32xf32>, vector<128x32xf32>, vector<128x32xf32> -> vector<128x128xf32>
    %13 = vector.broadcast %4 : vector<1x128xf32> to vector<128x128xf32>
    %14 = arith.subf %13, %12 : vector<128x128xf32>
    %15 = math.tanh %14 : vector<128x128xf32>
    %16 = arith.truncf %15 : vector<128x128xf32> to vector<128x128xbf16>
    %c0_7 = arith.constant 0 : index
    %c0_8 = arith.constant 0 : index
    %17 = vector.load %arg5[%c0_7, %c0_8] : memref<2x128xbf16, #tpu.memory_space<vmem>>, vector<2x128xbf16>
    %cst = arith.constant dense<0.000000e+00> : vector<2x128xf32>
    %18 = tpu.matmul %17, %10, %cst {dimension_numbers = #tpu.dot_dimension_numbers<[1], [0], [0], [1], [0, 0, 1, 1], [], []>} : vector<2x128xbf16>, vector<128x128xbf16>, vector<2x128xf32> -> vector<2x128xf32>
    %c0_9 = arith.constant 0 : index
    %c0_10 = arith.constant 0 : index
    %19 = vector.load %arg6[%c0_9, %c0_10] : memref<2x128xbf16, #tpu.memory_space<vmem>>, vector<2x128xbf16>
    %cst_11 = arith.constant dense<0.000000e+00> : vector<2x128xf32>
    %20 = tpu.matmul %19, %16, %cst_11 {dimension_numbers = #tpu.dot_dimension_numbers<[1], [0], [0], [1], [0, 0, 1, 1], [], []>} : vector<2x128xbf16>, vector<128x128xbf16>, vector<2x128xf32> -> vector<2x128xf32>
    %c0_12 = arith.constant 0 : index
    %c0_13 = arith.constant 0 : index
    %c0_14 = arith.constant 0 : index
    %21 = vector.load %arg7[%c0_12, %c0_13, %c0_14] : memref<1x2x128xf32, #tpu.memory_space<vmem>>, vector<1x2x128xf32>
    %22 = arith.subf %18, %20 : vector<2x128xf32>
    %23 = vector.shape_cast %22 : vector<2x128xf32> to vector<1x2x128xf32>
    %24 = arith.addf %21, %23 : vector<1x2x128xf32>
    %c0_15 = arith.constant 0 : index
    %c0_16 = arith.constant 0 : index
    %c0_17 = arith.constant 0 : index
    %25 = vector.load %arg7[%c0_15, %c0_16, %c0_17] : memref<1x2x128xf32, #tpu.memory_space<vmem>>, vector<1x2x128xf32>
    tpu.vector_store %arg7[%c0_15, %c0_16, %c0_17], %24 {strides = array<i32>} : memref<1x2x128xf32, #tpu.memory_space<vmem>>, vector<1x2x128xf32>,
    return
  }
  func.func @transform_0(%arg0: i32, %arg1: i32) -> (i32, i32, i32) {
    %c0_i32 = arith.constant 0 : i32
    %c0_i32_0 = arith.constant 0 : i32
    %c0_i32_1 = arith.constant 0 : i32
    return %arg0, %c0_i32, %c0_i32_0 : i32, i32, i32
  }
  func.func @transform_1(%arg0: i32, %arg1: i32) -> (i32, i32) {
    %c0_i32 = arith.constant 0 : i32
    %c0_i32_0 = arith.constant 0 : i32
    return %arg1, %c0_i32 : i32, i32
  }
  func.func @transform_2(%arg0: i32, %arg1: i32) -> (i32, i32) {
    %c0_i32 = arith.constant 0 : i32
    %c0_i32_0 = arith.constant 0 : i32
    return %arg1, %c0_i32 : i32, i32
  }
  func.func @transform_3(%arg0: i32, %arg1: i32) -> (i32, i32) {
    %c0_i32 = arith.constant 0 : i32
    %c0_i32_0 = arith.constant 0 : i32
    return %c0_i32, %arg1 : i32, i32
  }
  func.func @transform_4(%arg0: i32, %arg1: i32) -> (i32, i32) {
    %c0_i32 = arith.constant 0 : i32
    %c0_i32_0 = arith.constant 0 : i32
    return %c0_i32, %arg1 : i32, i32
  }
  func.func @transform_5(%arg0: i32, %arg1: i32) -> (i32, i32, i32) {
    %c0_i32 = arith.constant 0 : i32
    %c0_i32_0 = arith.constant 0 : i32
    %c0_i32_1 = arith.constant 0 : i32
    return %arg0, %c0_i32, %c0_i32_0 : i32, i32, i32
  }
}

</mosaic_0001>

<llo_original>
// kernel: tpu_custom_call.1
$region0: #{tpu_custom_call.1}
  #allocation0 [shape = 'u32[]', space=smem, size = 0x4, offset = 0x4, fixed_abs, tag = 'smem constant byte address 0x4 - core index']
  #allocation1 [shape = 'u32[144,128]{1,0:T(1,128)}', space=vmem, size = 0x12000, scoped, tag = 'internal scratch']
  %s0 = inlined_call_operand.vmem [shape: f32[4,1,128], index: 0, kind: input, shape index: {}]
  %s1 = inlined_call_operand.vmem [shape: f32[128,32], index: 1, kind: input, shape index: {}]
  %s2 = inlined_call_operand.vmem [shape: f32[128,32], index: 2, kind: input, shape index: {}]
  %s3 = inlined_call_operand.vmem [shape: bf16[2,128], index: 3, kind: input, shape index: {}]
  %s4 = inlined_call_operand.vmem [shape: bf16[2,128], index: 4, kind: input, shape index: {}]
  %s5 = inlined_call_operand.hbm [shape: f32[4,2,128], index: 5, kind: output, shape index: {}]
  %s6 = sld [smem:[#allocation0]]
  $region57: #{tpu_custom_call.1} parent=0
    _
  %s8 = ssub.s32 1, %s6
  %s9 = scalar_select 0, %s8, %s6
  $region1: #{tpu_custom_call.1} parent=0
    #allocation2 [shape = 'u8[2048]{0}', space=vmem, size = 0x800, scoped, tag = 'output window, operand 0']
    #allocation3 [shape = 's32[2]{0}', space=sflag, size = 0x8, scoped, tag = 'scoped memory for tpu_custom_call.1']
    %10 = vsyncpa [#allocation3], 0
    %s11 = scalar_lea.sflag [#allocation3], 1
    %12 = vsyncpa %s11, 0
    loop: start=0, step=1, limit=6
    $region2: #{tpu_custom_call.1} parent=1 // loop_pre_header
      _
    $region3: #{tpu_custom_call.1} parent=1 // loop_header
      %s14 = sphi 0, %s18
      %p15 = scmp.ge.s32.totalorder %s14, 6
      %s21 = sphi 0, %s33
      %s22 = sphi 0, %s29
      %s23 = sphi 0, %s21
      %s24 = sphi 0, %s22
      %s25 = sphi 0, %s23
      %s26 = sphi 0, %s24
      %s36 = sphi 0, %s38
      %s39 = sphi 0, %s36
      %s40 = sphi 0, %s39
      %s56 = sphi 0, %s40
      %s62 = sphi 0, %s64
      %s65 = sphi 0, %s62
      %s66 = sphi 0, %s65
      %s82 = sphi 0, %s66
      %s88 = sphi 0, %s90
      %s91 = sphi 0, %s88
      %s92 = sphi 0, %s91
      %s108 = sphi 0, %s92
      %s114 = sphi 0, %s116
      %s117 = sphi 0, %s114
      %s118 = sphi 0, %s117
      %s134 = sphi 0, %s118
      %s140 = sphi 0, %s142
      %s143 = sphi 0, %s140
      %s144 = sphi 0, %s143
      %s160 = sphi 0, %s144
      %s166 = sphi 0, %s168
      %s169 = sphi 0, %s166
      %s170 = sphi 0, %s169
      %s186 = sphi 0, %s170
    $region4: #{tpu_custom_call.1} parent=1 // loop_header_branch
      %17 = sbr.rel (%p15) target = $region8
    $region5: #{tpu_custom_call.1} parent=1 // loop_body
      %s19 = ssub.s32 %s14, 1
      %s20 = ssub.s32 %s14, 2
      %s27 = sadd.s32 1, %s22
      %p28 = scmp.ge.s32.totalorder %s27, 1
      %s29 = scalar_select %p28, 0, %s27
      %s30 = sadd.s32 1, %s21
      %s31 = scalar_select %p28, %s30, %s21
      %p32 = scmp.ge.s32.totalorder %s31, 4
      %s33 = scalar_select %p32, 0, %s31
      %s34 = ssub.s32 %s21, %s33
      %p35 = scmp.eq.s32.totalorder %s34, 0
      %s37 = sadd.s32 %s36, 1
      %s38 = scalar_select %p35, %s36, %s37
      %p41 = pneg %p35
      %p42 = scmp.eq.s32.totalorder %s14, 3
      %p43 = por %p41, %p42
      %p44 = scmp.ne.s32.totalorder %s36, %s39
      %p45 = scmp.eq.s32.totalorder %s14, 0
      %p46 = por %p44, %p45
      %p47 = scmp.ne.s32.totalorder %s36, %s39
      %p48 = scmp.eq.s32.totalorder %s19, 3
      %p49 = por %p47, %p48
      %p50 = scmp.ne.s32.totalorder %s39, %s40
      %p51 = scmp.eq.s32.totalorder %s19, 0
      %p52 = por %p50, %p51
      %p53 = scmp.ne.s32.totalorder %s39, %s40
      %p54 = scmp.eq.s32.totalorder %s20, 3
      %p55 = por %p53, %p54
      %p57 = scmp.ne.s32.totalorder %s40, %s56
      %p58 = scmp.eq.s32.totalorder %s20, 0
      %p59 = por %p57, %p58
      %s60 = ssub.s32 %s22, %s29
      %p61 = scmp.eq.s32.totalorder %s60, 0
      %s63 = sadd.s32 %s62, 1
      %s64 = scalar_select %p61, %s62, %s63
      %p67 = pneg %p61
      %p68 = scmp.eq.s32.totalorder %s14, 3
      %p69 = por %p67, %p68
      %p70 = scmp.ne.s32.totalorder %s62, %s65
      %p71 = scmp.eq.s32.totalorder %s14, 0
      %p72 = por %p70, %p71
      %p73 = scmp.ne.s32.totalorder %s62, %s65
      %p74 = scmp.eq.s32.totalorder %s19, 3
      %p75 = por %p73, %p74
      %p76 = scmp.ne.s32.totalorder %s65, %s66
      %p77 = scmp.eq.s32.totalorder %s19, 0
      %p78 = por %p76, %p77
      %p79 = scmp.ne.s32.totalorder %s65, %s66
      %p80 = scmp.eq.s32.totalorder %s20, 3
      %p81 = por %p79, %p80
      %p83 = scmp.ne.s32.totalorder %s66, %s82
      %p84 = scmp.eq.s32.totalorder %s20, 0
      %p85 = por %p83, %p84
      %s86 = ssub.s32 %s22, %s29
      %p87 = scmp.eq.s32.totalorder %s86, 0
      %s89 = sadd.s32 %s88, 1
      %s90 = scalar_select %p87, %s88, %s89
      %p93 = pneg %p87
      %p94 = scmp.eq.s32.totalorder %s14, 3
      %p95 = por %p93, %p94
      %p96 = scmp.ne.s32.totalorder %s88, %s91
      %p97 = scmp.eq.s32.totalorder %s14, 0
      %p98 = por %p96, %p97
      %p99 = scmp.ne.s32.totalorder %s88, %s91
      %p100 = scmp.eq.s32.totalorder %s19, 3
      %p101 = por %p99, %p100
      %p102 = scmp.ne.s32.totalorder %s91, %s92
      %p103 = scmp.eq.s32.totalorder %s19, 0
      %p104 = por %p102, %p103
      %p105 = scmp.ne.s32.totalorder %s91, %s92
      %p106 = scmp.eq.s32.totalorder %s20, 3
      %p107 = por %p105, %p106
      %p109 = scmp.ne.s32.totalorder %s92, %s108
      %p110 = scmp.eq.s32.totalorder %s20, 0
      %p111 = por %p109, %p110
      %s112 = ssub.s32 %s22, %s29
      %p113 = scmp.eq.s32.totalorder %s112, 0
      %s115 = sadd.s32 %s114, 1
      %s116 = scalar_select %p113, %s114, %s115
      %p119 = pneg %p113
      %p120 = scmp.eq.s32.totalorder %s14, 3
      %p121 = por %p119, %p120
      %p122 = scmp.ne.s32.totalorder %s114, %s117
      %p123 = scmp.eq.s32.totalorder %s14, 0
      %p124 = por %p122, %p123
      %p125 = scmp.ne.s32.totalorder %s114, %s117
      %p126 = scmp.eq.s32.totalorder %s19, 3
      %p127 = por %p125, %p126
      %p128 = scmp.ne.s32.totalorder %s117, %s118
      %p129 = scmp.eq.s32.totalorder %s19, 0
      %p130 = por %p128, %p129
      %p131 = scmp.ne.s32.totalorder %s117, %s118
      %p132 = scmp.eq.s32.totalorder %s20, 3
      %p133 = por %p131, %p132
      %p135 = scmp.ne.s32.totalorder %s118, %s134
      %p136 = scmp.eq.s32.totalorder %s20, 0
      %p137 = por %p135, %p136
      %s138 = ssub.s32 %s22, %s29
      %p139 = scmp.eq.s32.totalorder %s138, 0
      %s141 = sadd.s32 %s140, 1
      %s142 = scalar_select %p139, %s140, %s141
      %p145 = pneg %p139
      %p146 = scmp.eq.s32.totalorder %s14, 3
      %p147 = por %p145, %p146
      %p148 = scmp.ne.s32.totalorder %s140, %s143
      %p149 = scmp.eq.s32.totalorder %s14, 0
      %p150 = por %p148, %p149
      %p151 = scmp.ne.s32.totalorder %s140, %s143
      %p152 = scmp.eq.s32.totalorder %s19, 3
      %p153 = por %p151, %p152
      %p154 = scmp.ne.s32.totalorder %s143, %s144
      %p155 = scmp.eq.s32.totalorder %s19, 0
      %p156 = por %p154, %p155
      %p157 = scmp.ne.s32.totalorder %s143, %s144
      %p158 = scmp.eq.s32.totalorder %s20, 3
      %p159 = por %p157, %p158
      %p161 = scmp.ne.s32.totalorder %s144, %s160
      %p162 = scmp.eq.s32.totalorder %s20, 0
      %p163 = por %p161, %p162
      %s164 = ssub.s32 %s21, %s33
      %p165 = scmp.eq.s32.totalorder %s164, 0
      %s167 = sadd.s32 %s166, 1
      %s168 = scalar_select %p165, %s166, %s167
      %p171 = pneg %p165
      %p172 = scmp.eq.s32.totalorder %s14, 3
      %p173 = por %p171, %p172
      %p174 = scmp.ne.s32.totalorder %s166, %s169
      %p175 = scmp.eq.s32.totalorder %s14, 0
      %p176 = por %p174, %p175
      %p177 = scmp.ne.s32.totalorder %s166, %s169
      %p178 = scmp.eq.s32.totalorder %s19, 3
      %p179 = por %p177, %p178
      %p180 = scmp.ne.s32.totalorder %s169, %s170
      %p181 = scmp.eq.s32.totalorder %s19, 0
      %p182 = por %p180, %p181
      %p183 = scmp.ne.s32.totalorder %s169, %s170
      %p184 = scmp.eq.s32.totalorder %s20, 3
      %p185 = por %p183, %p184
      %p187 = scmp.ne.s32.totalorder %s170, %s186
      %p188 = scmp.eq.s32.totalorder %s20, 0
      %p189 = por %p187, %p188
      %p190 = scmp.le.s32.totalorder 1, %s14
      %p191 = scmp.lt.s32.totalorder %s14, 5
      %p192 = pnand %p190, %p191
      %p193 = pneg %p192
      // Predicated region
      $region9: #{tpu_custom_call.1} parent=5 // pred_check
        _
      $region10: #{tpu_custom_call.1} parent=5 // pred_check_branch
        %195 = sbr.rel (%p192) target = $region12
      $region11: #{tpu_custom_call.1} parent=5 // pred_region
        %s196 = ssub.s32 %s14, 1
        // Predicated region
        $region13: #{tpu_custom_call.1} parent=11 // pred_check
          %p197 = pneg %p78
        $region14: #{tpu_custom_call.1} parent=11 // pred_check_branch
          %199 = sbr.rel (%p197) target = $region16
        $region15: #{tpu_custom_call.1} parent=11 // pred_region
          %s200 = smul.u32 16, %s24
          %p201 = scmp.lt.s32.totalorder %s200, 15
          %s202 = scalar_select %p201, %s200, 15
          %s203 = smul.addr %s202, 8
          %s204 = scalar_lea.vmem %s1, %s203
          %s205 = smul.u32 16, %s24
        $region16: #{tpu_custom_call.1} parent=11 // pred_fallthru
          _
        // Predicated region
        $region17: #{tpu_custom_call.1} parent=11 // pred_check
          %p206 = pneg %p104
        $region18: #{tpu_custom_call.1} parent=11 // pred_check_branch
          %208 = sbr.rel (%p206) target = $region20
        $region19: #{tpu_custom_call.1} parent=11 // pred_region
          %s209 = smul.u32 16, %s24
          %p210 = scmp.lt.s32.totalorder %s209, 15
          %s211 = scalar_select %p210, %s209, 15
          %s212 = smul.addr %s211, 8
          %s213 = scalar_lea.vmem %s2, %s212
          %s214 = smul.u32 16, %s24
        $region20: #{tpu_custom_call.1} parent=11 // pred_fallthru
          _
        // Predicated region
        $region21: #{tpu_custom_call.1} parent=11 // pred_check
          %p215 = pneg %p130
        $region22: #{tpu_custom_call.1} parent=11 // pred_check_branch
          %217 = sbr.rel (%p215) target = $region24
        $region23: #{tpu_custom_call.1} parent=11 // pred_region
          %p218 = scmp.lt.s32.totalorder %s24, 0
          %s219 = scalar_select %p218, %s24, 0
          %s220 = scalar_lea.vmem %s3, %s219
        $region24: #{tpu_custom_call.1} parent=11 // pred_fallthru
          _
        // Predicated region
        $region25: #{tpu_custom_call.1} parent=11 // pred_check
          %p221 = pneg %p156
        $region26: #{tpu_custom_call.1} parent=11 // pred_check_branch
          %223 = sbr.rel (%p221) target = $region28
        $region27: #{tpu_custom_call.1} parent=11 // pred_region
          %p224 = scmp.lt.s32.totalorder %s24, 0
          %s225 = scalar_select %p224, %s24, 0
          %s226 = scalar_lea.vmem %s4, %s225
        $region28: #{tpu_custom_call.1} parent=11 // pred_fallthru
          _
      $region12: #{tpu_custom_call.1} parent=5 // pred_fallthru
        _
      %p227 = scmp.lt.s32.totalorder %s14, 4
      // Predicated region
      $region29: #{tpu_custom_call.1} parent=5 // pred_check
        %p228 = pneg %p227
      $region30: #{tpu_custom_call.1} parent=5 // pred_check_branch
        %230 = sbr.rel (%p228) target = $region32
      $region31: #{tpu_custom_call.1} parent=5 // pred_region
        // Predicated region
        $region33: #{tpu_custom_call.1} parent=31 // pred_check
          %p231 = pneg %p46
        $region34: #{tpu_custom_call.1} parent=31 // pred_check_branch
          %233 = sbr.rel (%p231) target = $region36
        $region35: #{tpu_custom_call.1} parent=31 // pred_region
          %p234 = scmp.lt.s32.totalorder %s21, 3
          %s235 = scalar_select %p234, %s21, 3
          %s236 = scalar_lea.vmem %s0, %s235
        $region36: #{tpu_custom_call.1} parent=31 // pred_fallthru
          _
      $region32: #{tpu_custom_call.1} parent=5 // pred_fallthru
        _
      %p237 = scmp.le.s32.totalorder 1, %s14
      %p238 = scmp.lt.s32.totalorder %s14, 5
      %p239 = pnand %p237, %p238
      %p240 = pneg %p239
      // Predicated region
      $region37: #{tpu_custom_call.1} parent=5 // pred_check
        _
      $region38: #{tpu_custom_call.1} parent=5 // pred_check_branch
        %242 = sbr.rel (%p239) target = $region40
      $region39: #{tpu_custom_call.1} parent=5 // pred_region
        %s243 = ssub.s32 %s14, 1
        %p244 = scmp.lt.s32.totalorder %s23, 3
        %s245 = scalar_select %p244, %s23, 3
        %s246 = scalar_lea.vmem %s0, %s245
        %p247 = pneg %p52
        %p248 = pneg %p49
        %s249 = smul.u32 16, %s24
        %p250 = scmp.lt.s32.totalorder %s249, 15
        %s251 = scalar_select %p250, %s249, 15
        %s252 = smul.addr %s251, 8
        %s253 = scalar_lea.vmem %s1, %s252
        %p254 = pneg %p78
        %p255 = pneg %p75
        %s256 = smul.u32 16, %s24
        %p257 = scmp.lt.s32.totalorder %s256, 15
        %s258 = scalar_select %p257, %s256, 15
        %s259 = smul.addr %s258, 8
        %s260 = scalar_lea.vmem %s2, %s259
        %p261 = pneg %p104
        %p262 = pneg %p101
        %p263 = scmp.lt.s32.totalorder %s24, 0
        %s264 = scalar_select %p263, %s24, 0
        %s265 = scalar_lea.vmem %s3, %s264
        %p266 = pneg %p130
        %p267 = pneg %p127
        %p268 = scmp.lt.s32.totalorder %s24, 0
        %s269 = scalar_select %p268, %s24, 0
        %s270 = scalar_lea.vmem %s4, %s269
        %p271 = pneg %p156
        %p272 = pneg %p153
        %p273 = pneg %p182
        %p274 = pneg %p179
        %s275 = sand.u32 %s169, 1
        %s276 = scalar_lea.sflag [#allocation3], %s275
        %s277 = sand.u32 %s169, 1
        %s278 = smul.addr %s277, 2
        %s279 = scalar_lea.vmem [#allocation2], %s278
        %p280 = scmp.lt.s32.totalorder %s23, 3
        %s281 = scalar_select %p280, %s23, 3
        %s282 = scalar_lea.vmem %s0, %s281
        %s283 = smul.u32 16, %s24
        %p284 = scmp.lt.s32.totalorder %s283, 15
        %s285 = scalar_select %p284, %s283, 15
        %s286 = smul.addr %s285, 8
        %s287 = scalar_lea.vmem %s1, %s286
        %s288 = smul.u32 16, %s24
        %s289 = smul.u32 16, %s24
        %p290 = scmp.lt.s32.totalorder %s289, 15
        %s291 = scalar_select %p290, %s289, 15
        %s292 = smul.addr %s291, 8
        %s293 = scalar_lea.vmem %s2, %s292
        %s294 = smul.u32 16, %s24
        %p295 = scmp.lt.s32.totalorder %s24, 0
        %s296 = scalar_select %p295, %s24, 0
        %s297 = scalar_lea.vmem %s3, %s296
        %p298 = scmp.lt.s32.totalorder %s24, 0
        %s299 = scalar_select %p298, %s24, 0
        %s300 = scalar_lea.vmem %s4, %s299
        %p302 = scmp.eq.s32.totalorder %s24, 0
        // Predicated region
        $region41: #{tpu_custom_call.1} parent=39 // pred_check
          %p303 = pneg %p302
        $region42: #{tpu_custom_call.1} parent=39 // pred_check_branch
          %305 = sbr.rel (%p303) target = $region44
        $region43: #{tpu_custom_call.1} parent=39 // pred_region
          %306 = vst [vmem:[%s279] sm:$0x3] 0.0
        $region44: #{tpu_custom_call.1} parent=39 // pred_fallthru
          _
        %v307 = vld [vmem:[%s282] sm:$0x1]
        %v308 = vld [vmem:[%s287] sm:$0xff]
        %v309 = vld [vmem:[%s287 + $0x8] sm:$0xff]
        %v310 = vld [vmem:[%s287 + $0x10] sm:$0xff]
        %v311 = vld [vmem:[%s287 + $0x18] sm:$0xff]
        %v312 = vld [vmem:[%s287 + $0x20] sm:$0xff]
        %v313 = vld [vmem:[%s287 + $0x28] sm:$0xff]
        %v314 = vld [vmem:[%s287 + $0x30] sm:$0xff]
        %v315 = vld [vmem:[%s287 + $0x38] sm:$0xff]
        %v316 = vld [vmem:[%s287 + $0x40] sm:$0xff]
        %v317 = vld [vmem:[%s287 + $0x48] sm:$0xff]
        %v318 = vld [vmem:[%s287 + $0x50] sm:$0xff]
        %v319 = vld [vmem:[%s287 + $0x58] sm:$0xff]
        %v320 = vld [vmem:[%s287 + $0x60] sm:$0xff]
        %v321 = vld [vmem:[%s287 + $0x68] sm:$0xff]
        %v322 = vld [vmem:[%s287 + $0x70] sm:$0xff]
        %v323 = vld [vmem:[%s287 + $0x78] sm:$0xff]
        %340 = vrot.lane.b32.xlu0 %v308, 32
        %v341 = vpop.permute.xlu0 %340
        %342 = vrot.lane.b32.xlu0 %v309, 32
        %v343 = vpop.permute.xlu0 %342
        %344 = vrot.lane.b32.xlu0 %v310, 32
        %v345 = vpop.permute.xlu0 %344
        %346 = vrot.lane.b32.xlu0 %v311, 32
        %v347 = vpop.permute.xlu0 %346
        %348 = vrot.lane.b32.xlu0 %v312, 32
        %v349 = vpop.permute.xlu0 %348
        %350 = vrot.lane.b32.xlu0 %v313, 32
        %v351 = vpop.permute.xlu0 %350
        %352 = vrot.lane.b32.xlu0 %v314, 32
        %v353 = vpop.permute.xlu0 %352
        %354 = vrot.lane.b32.xlu0 %v315, 32
        %v355 = vpop.permute.xlu0 %354
        %356 = vrot.lane.b32.xlu0 %v316, 32
        %v357 = vpop.permute.xlu0 %356
        %358 = vrot.lane.b32.xlu0 %v317, 32
        %v359 = vpop.permute.xlu0 %358
        %360 = vrot.lane.b32.xlu0 %v318, 32
        %v361 = vpop.permute.xlu0 %360
        %362 = vrot.lane.b32.xlu0 %v319, 32
        %v363 = vpop.permute.xlu0 %362
        %364 = vrot.lane.b32.xlu0 %v320, 32
        %v365 = vpop.permute.xlu0 %364
        %366 = vrot.lane.b32.xlu0 %v321, 32
        %v367 = vpop.permute.xlu0 %366
        %368 = vrot.lane.b32.xlu0 %v322, 32
        %v369 = vpop.permute.xlu0 %368
        %370 = vrot.lane.b32.xlu0 %v323, 32
        %v371 = vpop.permute.xlu0 %370
        %388 = vrot.lane.b32.xlu0 %v308, 64
        %v389 = vpop.permute.xlu0 %388
        %390 = vrot.lane.b32.xlu0 %v309, 64
        %v391 = vpop.permute.xlu0 %390
        %392 = vrot.lane.b32.xlu0 %v310, 64
        %v393 = vpop.permute.xlu0 %392
        %394 = vrot.lane.b32.xlu0 %v311, 64
        %v395 = vpop.permute.xlu0 %394
        %396 = vrot.lane.b32.xlu0 %v312, 64
        %v397 = vpop.permute.xlu0 %396
        %398 = vrot.lane.b32.xlu0 %v313, 64
        %v399 = vpop.permute.xlu0 %398
        %400 = vrot.lane.b32.xlu0 %v314, 64
        %v401 = vpop.permute.xlu0 %400
        %402 = vrot.lane.b32.xlu0 %v315, 64
        %v403 = vpop.permute.xlu0 %402
        %404 = vrot.lane.b32.xlu0 %v316, 64
        %v405 = vpop.permute.xlu0 %404
        %406 = vrot.lane.b32.xlu0 %v317, 64
        %v407 = vpop.permute.xlu0 %406
        %408 = vrot.lane.b32.xlu0 %v318, 64
        %v409 = vpop.permute.xlu0 %408
        %410 = vrot.lane.b32.xlu0 %v319, 64
        %v411 = vpop.permute.xlu0 %410
        %412 = vrot.lane.b32.xlu0 %v320, 64
        %v413 = vpop.permute.xlu0 %412
        %414 = vrot.lane.b32.xlu0 %v321, 64
        %v415 = vpop.permute.xlu0 %414
        %416 = vrot.lane.b32.xlu0 %v322, 64
        %v417 = vpop.permute.xlu0 %416
        %418 = vrot.lane.b32.xlu0 %v323, 64
        %v419 = vpop.permute.xlu0 %418
        %436 = vrot.lane.b32.xlu0 %v308, 96
        %v437 = vpop.permute.xlu0 %436
        %438 = vrot.lane.b32.xlu0 %v309, 96
        %v439 = vpop.permute.xlu0 %438
        %440 = vrot.lane.b32.xlu0 %v310, 96
        %v441 = vpop.permute.xlu0 %440
        %442 = vrot.lane.b32.xlu0 %v311, 96
        %v443 = vpop.permute.xlu0 %442
        %444 = vrot.lane.b32.xlu0 %v312, 96
        %v445 = vpop.permute.xlu0 %444
        %446 = vrot.lane.b32.xlu0 %v313, 96
        %v447 = vpop.permute.xlu0 %446
        %448 = vrot.lane.b32.xlu0 %v314, 96
        %v449 = vpop.permute.xlu0 %448
        %450 = vrot.lane.b32.xlu0 %v315, 96
        %v451 = vpop.permute.xlu0 %450
        %452 = vrot.lane.b32.xlu0 %v316, 96
        %v453 = vpop.permute.xlu0 %452
        %454 = vrot.lane.b32.xlu0 %v317, 96
        %v455 = vpop.permute.xlu0 %454
        %456 = vrot.lane.b32.xlu0 %v318, 96
        %v457 = vpop.permute.xlu0 %456
        %458 = vrot.lane.b32.xlu0 %v319, 96
        %v459 = vpop.permute.xlu0 %458
        %460 = vrot.lane.b32.xlu0 %v320, 96
        %v461 = vpop.permute.xlu0 %460
        %462 = vrot.lane.b32.xlu0 %v321, 96
        %v463 = vpop.permute.xlu0 %462
        %464 = vrot.lane.b32.xlu0 %v322, 96
        %v465 = vpop.permute.xlu0 %464
        %466 = vrot.lane.b32.xlu0 %v323, 96
        %v467 = vpop.permute.xlu0 %466
        %vm484 = vcmask 261120
        %v485 = vsel %vm484, %v308, %v341
        %v486 = vsel %vm484, %v309, %v343
        %v487 = vsel %vm484, %v310, %v345
        %v488 = vsel %vm484, %v311, %v347
        %v489 = vsel %vm484, %v312, %v349
        %v490 = vsel %vm484, %v313, %v351
        %v491 = vsel %vm484, %v314, %v353
        %v492 = vsel %vm484, %v315, %v355
        %v493 = vsel %vm484, %v316, %v357
        %v494 = vsel %vm484, %v317, %v359
        %v495 = vsel %vm484, %v318, %v361
        %v496 = vsel %vm484, %v319, %v363
        %v497 = vsel %vm484, %v320, %v365
        %v498 = vsel %vm484, %v321, %v367
        %v499 = vsel %vm484, %v322, %v369
        %v500 = vsel %vm484, %v323, %v371
        %vm501 = vcmask 523264
        %v502 = vsel %vm501, %v485, %v389
        %v503 = vsel %vm501, %v486, %v391
        %v504 = vsel %vm501, %v487, %v393
        %v505 = vsel %vm501, %v488, %v395
        %v506 = vsel %vm501, %v489, %v397
        %v507 = vsel %vm501, %v490, %v399
        %v508 = vsel %vm501, %v491, %v401
        %v509 = vsel %vm501, %v492, %v403
        %v510 = vsel %vm501, %v493, %v405
        %v511 = vsel %vm501, %v494, %v407
        %v512 = vsel %vm501, %v495, %v409
        %v513 = vsel %vm501, %v496, %v411
        %v514 = vsel %vm501, %v497, %v413
        %v515 = vsel %vm501, %v498, %v415
        %v516 = vsel %vm501, %v499, %v417
        %v517 = vsel %vm501, %v500, %v419
        %vm518 = vcmask 785408
        %v519 = vsel %vm518, %v502, %v437
        %v520 = vsel %vm518, %v503, %v439
        %v521 = vsel %vm518, %v504, %v441
        %v522 = vsel %vm518, %v505, %v443
        %v523 = vsel %vm518, %v506, %v445
        %v524 = vsel %vm518, %v507, %v447
        %v525 = vsel %vm518, %v508, %v449
        %v526 = vsel %vm518, %v509, %v451
        %v527 = vsel %vm518, %v510, %v453
        %v528 = vsel %vm518, %v511, %v455
        %v529 = vsel %vm518, %v512, %v457
        %v530 = vsel %vm518, %v513, %v459
        %v531 = vsel %vm518, %v514, %v461
        %v532 = vsel %vm518, %v515, %v463
        %v533 = vsel %vm518, %v516, %v465
        %v534 = vsel %vm518, %v517, %v467
        %v536 = vlaneseq
        %v537 = vshrl.u32 %v536, 7
        %v538 = vsub.s32 0, %v537
        %v539 = vrot.slane %v307, %v538
        %v541 = vsub.f32 %v539, %v519
        %v542 = vsub.f32 %v539, %v520
        %v543 = vsub.f32 %v539, %v521
        %v544 = vsub.f32 %v539, %v522
        %v545 = vsub.f32 %v539, %v523
        %v546 = vsub.f32 %v539, %v524
        %v547 = vsub.f32 %v539, %v525
        %v548 = vsub.f32 %v539, %v526
        %v549 = vsub.f32 %v539, %v527
        %v550 = vsub.f32 %v539, %v528
        %v551 = vsub.f32 %v539, %v529
        %v552 = vsub.f32 %v539, %v530
        %v553 = vsub.f32 %v539, %v531
        %v554 = vsub.f32 %v539, %v532
        %v555 = vsub.f32 %v539, %v533
        %v556 = vsub.f32 %v539, %v534
        %v557 = vtanh.pop %v541
        %v558 = vtanh.pop %v542
        %v559 = vtanh.pop %v543
        %v560 = vtanh.pop %v544
        %v561 = vtanh.pop %v545
        %v562 = vtanh.pop %v546
        %v563 = vtanh.pop %v547
        %v564 = vtanh.pop %v548
        %v565 = vtanh.pop %v549
        %v566 = vtanh.pop %v550
        %v567 = vtanh.pop %v551
        %v568 = vtanh.pop %v552
        %v569 = vtanh.pop %v553
        %v570 = vtanh.pop %v554
        %v571 = vtanh.pop %v555
        %v572 = vtanh.pop %v556
        %v573 = vpack.c.bf16 %v558, %v557
        %v574 = vpack.c.bf16 %v560, %v559
        %v575 = vpack.c.bf16 %v562, %v561
        %v576 = vpack.c.bf16 %v564, %v563
        %v577 = vpack.c.bf16 %v566, %v565
        %v578 = vpack.c.bf16 %v568, %v567
        %v579 = vpack.c.bf16 %v570, %v569
        %v580 = vpack.c.bf16 %v572, %v571
        %v581 = vld [vmem:[%s293] sm:$0xff]
        %v582 = vld [vmem:[%s293 + $0x8] sm:$0xff]
        %v583 = vld [vmem:[%s293 + $0x10] sm:$0xff]
        %v584 = vld [vmem:[%s293 + $0x18] sm:$0xff]
        %v585 = vld [vmem:[%s293 + $0x20] sm:$0xff]
        %v586 = vld [vmem:[%s293 + $0x28] sm:$0xff]
        %v587 = vld [vmem:[%s293 + $0x30] sm:$0xff]
        %v588 = vld [vmem:[%s293 + $0x38] sm:$0xff]
        %v589 = vld [vmem:[%s293 + $0x40] sm:$0xff]
        %v590 = vld [vmem:[%s293 + $0x48] sm:$0xff]
        %v591 = vld [vmem:[%s293 + $0x50] sm:$0xff]
        %v592 = vld [vmem:[%s293 + $0x58] sm:$0xff]
        %v593 = vld [vmem:[%s293 + $0x60] sm:$0xff]
        %v594 = vld [vmem:[%s293 + $0x68] sm:$0xff]
        %v595 = vld [vmem:[%s293 + $0x70] sm:$0xff]
        %v596 = vld [vmem:[%s293 + $0x78] sm:$0xff]
        %613 = vrot.lane.b32.xlu0 %v581, 32
        %v614 = vpop.permute.xlu0 %613
        %615 = vrot.lane.b32.xlu0 %v582, 32
        %v616 = vpop.permute.xlu0 %615
        %617 = vrot.lane.b32.xlu0 %v583, 32
        %v618 = vpop.permute.xlu0 %617
        %619 = vrot.lane.b32.xlu0 %v584, 32
        %v620 = vpop.permute.xlu0 %619
        %621 = vrot.lane.b32.xlu0 %v585, 32
        %v622 = vpop.permute.xlu0 %621
        %623 = vrot.lane.b32.xlu0 %v586, 32
        %v624 = vpop.permute.xlu0 %623
        %625 = vrot.lane.b32.xlu0 %v587, 32
        %v626 = vpop.permute.xlu0 %625
        %627 = vrot.lane.b32.xlu0 %v588, 32
        %v628 = vpop.permute.xlu0 %627
        %629 = vrot.lane.b32.xlu0 %v589, 32
        %v630 = vpop.permute.xlu0 %629
        %631 = vrot.lane.b32.xlu0 %v590, 32
        %v632 = vpop.permute.xlu0 %631
        %633 = vrot.lane.b32.xlu0 %v591, 32
        %v634 = vpop.permute.xlu0 %633
        %635 = vrot.lane.b32.xlu0 %v592, 32
        %v636 = vpop.permute.xlu0 %635
        %637 = vrot.lane.b32.xlu0 %v593, 32
        %v638 = vpop.permute.xlu0 %637
        %639 = vrot.lane.b32.xlu0 %v594, 32
        %v640 = vpop.permute.xlu0 %639
        %641 = vrot.lane.b32.xlu0 %v595, 32
        %v642 = vpop.permute.xlu0 %641
        %643 = vrot.lane.b32.xlu0 %v596, 32
        %v644 = vpop.permute.xlu0 %643
        %661 = vrot.lane.b32.xlu0 %v581, 64
        %v662 = vpop.permute.xlu0 %661
        %663 = vrot.lane.b32.xlu0 %v582, 64
        %v664 = vpop.permute.xlu0 %663
        %665 = vrot.lane.b32.xlu0 %v583, 64
        %v666 = vpop.permute.xlu0 %665
        %667 = vrot.lane.b32.xlu0 %v584, 64
        %v668 = vpop.permute.xlu0 %667
        %669 = vrot.lane.b32.xlu0 %v585, 64
        %v670 = vpop.permute.xlu0 %669
        %671 = vrot.lane.b32.xlu0 %v586, 64
        %v672 = vpop.permute.xlu0 %671
        %673 = vrot.lane.b32.xlu0 %v587, 64
        %v674 = vpop.permute.xlu0 %673
        %675 = vrot.lane.b32.xlu0 %v588, 64
        %v676 = vpop.permute.xlu0 %675
        %677 = vrot.lane.b32.xlu0 %v589, 64
        %v678 = vpop.permute.xlu0 %677
        %679 = vrot.lane.b32.xlu0 %v590, 64
        %v680 = vpop.permute.xlu0 %679
        %681 = vrot.lane.b32.xlu0 %v591, 64
        %v682 = vpop.permute.xlu0 %681
        %683 = vrot.lane.b32.xlu0 %v592, 64
        %v684 = vpop.permute.xlu0 %683
        %685 = vrot.lane.b32.xlu0 %v593, 64
        %v686 = vpop.permute.xlu0 %685
        %687 = vrot.lane.b32.xlu0 %v594, 64
        %v688 = vpop.permute.xlu0 %687
        %689 = vrot.lane.b32.xlu0 %v595, 64
        %v690 = vpop.permute.xlu0 %689
        %691 = vrot.lane.b32.xlu0 %v596, 64
        %v692 = vpop.permute.xlu0 %691
        %709 = vrot.lane.b32.xlu0 %v581, 96
        %v710 = vpop.permute.xlu0 %709
        %711 = vrot.lane.b32.xlu0 %v582, 96
        %v712 = vpop.permute.xlu0 %711
        %713 = vrot.lane.b32.xlu0 %v583, 96
        %v714 = vpop.permute.xlu0 %713
        %715 = vrot.lane.b32.xlu0 %v584, 96
        %v716 = vpop.permute.xlu0 %715
        %717 = vrot.lane.b32.xlu0 %v585, 96
        %v718 = vpop.permute.xlu0 %717
        %719 = vrot.lane.b32.xlu0 %v586, 96
        %v720 = vpop.permute.xlu0 %719
        %721 = vrot.lane.b32.xlu0 %v587, 96
        %v722 = vpop.permute.xlu0 %721
        %723 = vrot.lane.b32.xlu0 %v588, 96
        %v724 = vpop.permute.xlu0 %723
        %725 = vrot.lane.b32.xlu0 %v589, 96
        %v726 = vpop.permute.xlu0 %725
        %727 = vrot.lane.b32.xlu0 %v590, 96
        %v728 = vpop.permute.xlu0 %727
        %729 = vrot.lane.b32.xlu0 %v591, 96
        %v730 = vpop.permute.xlu0 %729
        %731 = vrot.lane.b32.xlu0 %v592, 96
        %v732 = vpop.permute.xlu0 %731
        %733 = vrot.lane.b32.xlu0 %v593, 96
        %v734 = vpop.permute.xlu0 %733
        %735 = vrot.lane.b32.xlu0 %v594, 96
        %v736 = vpop.permute.xlu0 %735
        %737 = vrot.lane.b32.xlu0 %v595, 96
        %v738 = vpop.permute.xlu0 %737
        %739 = vrot.lane.b32.xlu0 %v596, 96
        %v740 = vpop.permute.xlu0 %739
        %v757 = vsel %vm484, %v581, %v614
        %v758 = vsel %vm484, %v582, %v616
        %v759 = vsel %vm484, %v583, %v618
        %v760 = vsel %vm484, %v584, %v620
        %v761 = vsel %vm484, %v585, %v622
        %v762 = vsel %vm484, %v586, %v624
        %v763 = vsel %vm484, %v587, %v626
        %v764 = vsel %vm484, %v588, %v628
        %v765 = vsel %vm484, %v589, %v630
        %v766 = vsel %vm484, %v590, %v632
        %v767 = vsel %vm484, %v591, %v634
        %v768 = vsel %vm484, %v592, %v636
        %v769 = vsel %vm484, %v593, %v638
        %v770 = vsel %vm484, %v594, %v640
        %v771 = vsel %vm484, %v595, %v642
        %v772 = vsel %vm484, %v596, %v644
        %v773 = vsel %vm501, %v757, %v662
        %v774 = vsel %vm501, %v758, %v664
        %v775 = vsel %vm501, %v759, %v666
        %v776 = vsel %vm501, %v760, %v668
        %v777 = vsel %vm501, %v761, %v670
        %v778 = vsel %vm501, %v762, %v672
        %v779 = vsel %vm501, %v763, %v674
        %v780 = vsel %vm501, %v764, %v676
        %v781 = vsel %vm501, %v765, %v678
        %v782 = vsel %vm501, %v766, %v680
        %v783 = vsel %vm501, %v767, %v682
        %v784 = vsel %vm501, %v768, %v684
        %v785 = vsel %vm501, %v769, %v686
        %v786 = vsel %vm501, %v770, %v688
        %v787 = vsel %vm501, %v771, %v690
        %v788 = vsel %vm501, %v772, %v692
        %v789 = vsel %vm518, %v773, %v710
        %v790 = vsel %vm518, %v774, %v712
        %v791 = vsel %vm518, %v775, %v714
        %v792 = vsel %vm518, %v776, %v716
        %v793 = vsel %vm518, %v777, %v718
        %v794 = vsel %vm518, %v778, %v720
        %v795 = vsel %vm518, %v779, %v722
        %v796 = vsel %vm518, %v780, %v724
        %v797 = vsel %vm518, %v781, %v726
        %v798 = vsel %vm518, %v782, %v728
        %v799 = vsel %vm518, %v783, %v730
        %v800 = vsel %vm518, %v784, %v732
        %v801 = vsel %vm518, %v785, %v734
        %v802 = vsel %vm518, %v786, %v736
        %v803 = vsel %vm518, %v787, %v738
        %v804 = vsel %vm518, %v788, %v740
        %v805 = vsub.f32 %v539, %v789
        %v806 = vsub.f32 %v539, %v790
        %v807 = vsub.f32 %v539, %v791
        %v808 = vsub.f32 %v539, %v792
        %v809 = vsub.f32 %v539, %v793
        %v810 = vsub.f32 %v539, %v794
        %v811 = vsub.f32 %v539, %v795
        %v812 = vsub.f32 %v539, %v796
        %v813 = vsub.f32 %v539, %v797
        %v814 = vsub.f32 %v539, %v798
        %v815 = vsub.f32 %v539, %v799
        %v816 = vsub.f32 %v539, %v800
        %v817 = vsub.f32 %v539, %v801
        %v818 = vsub.f32 %v539, %v802
        %v819 = vsub.f32 %v539, %v803
        %v820 = vsub.f32 %v539, %v804
        %v821 = vtanh.pop %v805
        %v822 = vtanh.pop %v806
        %v823 = vtanh.pop %v807
        %v824 = vtanh.pop %v808
        %v825 = vtanh.pop %v809
        %v826 = vtanh.pop %v810
        %v827 = vtanh.pop %v811
        %v828 = vtanh.pop %v812
        %v829 = vtanh.pop %v813
        %v830 = vtanh.pop %v814
        %v831 = vtanh.pop %v815
        %v832 = vtanh.pop %v816
        %v833 = vtanh.pop %v817
        %v834 = vtanh.pop %v818
        %v835 = vtanh.pop %v819
        %v836 = vtanh.pop %v820
        %v837 = vpack.c.bf16 %v822, %v821
        %v838 = vpack.c.bf16 %v824, %v823
        %v839 = vpack.c.bf16 %v826, %v825
        %v840 = vpack.c.bf16 %v828, %v827
        %v841 = vpack.c.bf16 %v830, %v829
        %v842 = vpack.c.bf16 %v832, %v831
        %v843 = vpack.c.bf16 %v834, %v833
        %v844 = vpack.c.bf16 %v836, %v835
        %v845 = vld [vmem:[%s297] sm:$0x1]
        %846 = vmatprep.subr.bf16.mxu0 0
        %847 = vmatpush1.bf16.msra.mxu0 %v580
        %848 = vmatprep.subr.bf16.mxu0 0
        %849 = vmatpush1.bf16.msra.mxu0 %v579
        %850 = vmatprep.subr.bf16.mxu0 0
        %851 = vmatpush1.bf16.msra.mxu0 %v578
        %852 = vmatprep.subr.bf16.mxu0 0
        %853 = vmatpush1.bf16.msra.mxu0 %v577
        %854 = vmatprep.subr.bf16.mxu0 0
        %855 = vmatpush1.bf16.msra.mxu0 %v576
        %856 = vmatprep.subr.bf16.mxu0 0
        %857 = vmatpush1.bf16.msra.mxu0 %v575
        %858 = vmatprep.subr.bf16.mxu0 0
        %859 = vmatpush1.bf16.msra.mxu0 %v574
        %860 = vmatprep.subr.bf16.mxu0 0
        %861 = vmatpush1.bf16.msra.mxu0 %v573
        %862 = vmatprep.subr.bf16.mxu0 0
        %863 = vmatpush2.bf16.msra.mxu0 0
        %864 = vmatprep.subr.bf16.mxu0 0
        %865 = vmatpush2.bf16.msra.mxu0 0
        %866 = vmatprep.subr.bf16.mxu0 0
        %867 = vmatpush2.bf16.msra.mxu0 0
        %868 = vmatprep.subr.bf16.mxu0 0
        %869 = vmatpush2.bf16.msra.mxu0 0
        %870 = vmatprep.subr.bf16.mxu0 0
        %871 = vmatpush2.bf16.msra.mxu0 0
        %872 = vmatprep.subr.bf16.mxu0 0
        %873 = vmatpush2.bf16.msra.mxu0 0
        %874 = vmatprep.subr.bf16.mxu0 0
        %875 = vmatpush2.bf16.msra.mxu0 0
        %876 = vmatprep.subr.bf16.mxu0 0
        %877 = vmatpush2.bf16.msra.mxu0 0
        %878 = vmatprep.mubr.bf16.mxu0 0
        %879 = vmatmul.mubr.bf16.gmra.mxu0 %v845
        %v880 = vpop.f32.mrf.mxu0
        %v881 = vadd.f32 0.0, %v880
        %v882 = vpop.f32.mrf.mxu0
        %v883 = vpop.f32.mrf.mxu0
        %v884 = vpop.f32.mrf.mxu0
        %885 = vdwg.mxu0
        %v886 = vld [vmem:[%s300] sm:$0x1]
        %887 = vmatprep.subr.bf16.mxu0 0
        %888 = vmatpush1.bf16.msra.mxu0 %v844
        %889 = vmatprep.subr.bf16.mxu0 0
        %890 = vmatpush1.bf16.msra.mxu0 %v843
        %891 = vmatprep.subr.bf16.mxu0 0
        %892 = vmatpush1.bf16.msra.mxu0 %v842
        %893 = vmatprep.subr.bf16.mxu0 0
        %894 = vmatpush1.bf16.msra.mxu0 %v841
        %895 = vmatprep.subr.bf16.mxu0 0
        %896 = vmatpush1.bf16.msra.mxu0 %v840
        %897 = vmatprep.subr.bf16.mxu0 0
        %898 = vmatpush1.bf16.msra.mxu0 %v839
        %899 = vmatprep.subr.bf16.mxu0 0
        %900 = vmatpush1.bf16.msra.mxu0 %v838
        %901 = vmatprep.subr.bf16.mxu0 0
        %902 = vmatpush1.bf16.msra.mxu0 %v837
        %903 = vmatprep.subr.bf16.mxu0 0
        %904 = vmatpush2.bf16.msra.mxu0 0
        %905 = vmatprep.subr.bf16.mxu0 0
        %906 = vmatpush2.bf16.msra.mxu0 0
        %907 = vmatprep.subr.bf16.mxu0 0
        %908 = vmatpush2.bf16.msra.mxu0 0
        %909 = vmatprep.subr.bf16.mxu0 0
        %910 = vmatpush2.bf16.msra.mxu0 0
        %911 = vmatprep.subr.bf16.mxu0 0
        %912 = vmatpush2.bf16.msra.mxu0 0
        %913 = vmatprep.subr.bf16.mxu0 0
        %914 = vmatpush2.bf16.msra.mxu0 0
        %915 = vmatprep.subr.bf16.mxu0 0
        %916 = vmatpush2.bf16.msra.mxu0 0
        %917 = vmatprep.subr.bf16.mxu0 0
        %918 = vmatpush2.bf16.msra.mxu0 0
        %919 = vmatprep.mubr.bf16.mxu0 0
        %920 = vmatmul.mubr.bf16.gmra.mxu0 %v886
        %v921 = vpop.f32.mrf.mxu0
        %v922 = vadd.f32 0.0, %v921
        %v923 = vpop.f32.mrf.mxu0
        %v924 = vpop.f32.mrf.mxu0
        %v925 = vpop.f32.mrf.mxu0
        %926 = vdwg.mxu0
        %v927 = vld [vmem:[%s279] sm:$0x3]
        %v928 = vsub.f32 %v881, %v922
        %v929 = vadd.f32 %v927, %v928
        %930 = vst [vmem:[%s279] sm:$0x3] %v929
        %s931 = sand.u32 %s169, 1
        %s932 = scalar_lea.sflag [#allocation3], %s931
        %s933 = sand.u32 %s169, 1
        %s934 = smul.addr %s933, 2
        %s935 = scalar_lea.vmem [#allocation2], %s934
        // Predicated region
        $region45: #{tpu_custom_call.1} parent=39 // pred_check
          %p936 = pneg %p179
        $region46: #{tpu_custom_call.1} parent=39 // pred_check_branch
          %938 = sbr.rel (%p936) target = $region48
        $region47: #{tpu_custom_call.1} parent=39 // pred_region
          %s940 = ssub.s32 32, 32
          %941 = vsyncadd %s932, %s940
          %s942 = smul.addr %s23, 32
          %s943 = scalar_lea.hbm %s5, %s942
          %s945 = sshll.u32 %s935, 4
          %s946 = int_to_ptr.vmem [resolvable:$true] %s945
          %948 = dma.vmem_to_hbm [thread:$0]  %s946, 32, %s943, %s932
        $region48: #{tpu_custom_call.1} parent=39 // pred_fallthru
          _
      $region40: #{tpu_custom_call.1} parent=5 // pred_fallthru
        _
      %p949 = scmp.le.s32.totalorder 2, %s14
      // Predicated region
      $region49: #{tpu_custom_call.1} parent=5 // pred_check
        %p950 = pneg %p949
      $region50: #{tpu_custom_call.1} parent=5 // pred_check_branch
        %952 = sbr.rel (%p950) target = $region52
      $region51: #{tpu_custom_call.1} parent=5 // pred_region
        %s953 = ssub.s32 %s14, 2
        // Predicated region
        $region53: #{tpu_custom_call.1} parent=51 // pred_check
          %p954 = pneg %p185
        $region54: #{tpu_custom_call.1} parent=51 // pred_check_branch
          %956 = sbr.rel (%p954) target = $region56
        $region55: #{tpu_custom_call.1} parent=51 // pred_region
          %s957 = sand.u32 %s170, 1
          %s958 = scalar_lea.sflag [#allocation3], %s957
          %s959 = sand.u32 %s170, 1
          %s960 = smul.addr %s959, 2
          %s961 = scalar_lea.vmem [#allocation2], %s960
          %962 = dma.done %s958, 32
        $region56: #{tpu_custom_call.1} parent=51 // pred_fallthru
          _
      $region52: #{tpu_custom_call.1} parent=5 // pred_fallthru
        _
    $region6: #{tpu_custom_call.1} parent=1 // loop_footer
      %s18 = sadd.s32 1, %s14
    $region7: #{tpu_custom_call.1} parent=1 // loop_footer_branch
      %13 = sbr.rel target = $region3
    $region8: #{tpu_custom_call.1} parent=1 // loop_exit
      _
    %963 = vsyncpa [#allocation3], 1
    %s964 = scalar_lea.sflag [#allocation3], 1
    %965 = vsyncpa %s964, 1

</llo_original>
